<compile_context>
chip_gen: v7x
topology: tpu7x:2x2x1
jax: 0.10.0
libtpu: 0.0.40
codegen_flags: <defaults>
</compile_context>

<pallas_src>
import functools

import jax
import jax.numpy as jnp
from jax.experimental import pallas as pl
from jax.experimental.pallas import tpu as pltpu


def _cdiv(a: int, b: int) -> int:
    return -(-a // b)


def prepare_lm_head_params(weight, bias, *, param_dtype=jnp.bfloat16):
    """One-time parameter prep. Call at parameter-load time, OUTSIDE the hot path.

    * Transposes the PyTorch nn.Linear (V, E) weight to (E, V) so the kernel issues
      a plain row-major MXU contraction (no per-step relayout of the weight tile).
    * Casts the weight to `param_dtype` (bf16 by default) to halve the weight HBM
      stream — the LM head is weight-bandwidth bound for decode / small M.
    * Bias stays f32 (tiny; added to the f32 accumulator) reshaped to (1, V).
    """
    V, E = weight.shape
    assert bias.shape == (V,)
    w_t = jnp.asarray(weight).astype(param_dtype).T           # (E, V)
    b2d = jnp.asarray(bias).astype(jnp.float32).reshape(1, V)  # (1, V)
    return w_t, b2d


def _lmhead_kernel(x_ref, w_ref, b_ref, o_ref, *, compute_dtype):
    """Compute one (tm, tn) logits tile: full-E contraction + bias epilogue.

    x_ref: (tm, E)  activation slab (resident across the vocab grid axis)
    w_ref: (E, tn)  pre-transposed weight tile (standard MXU orientation)
    b_ref: (1, tn)  bias tile
    o_ref: (tm, tn) output tile
    """
    x = x_ref[...]
    if x.dtype != compute_dtype:
        x = x.astype(compute_dtype)
    w = w_ref[...]
    if w.dtype != compute_dtype:
        w = w.astype(compute_dtype)
    acc = jnp.dot(x, w, preferred_element_type=jnp.float32)
    o_ref[...] = (acc + b_ref[...].astype(jnp.float32)).astype(o_ref.dtype)


def lm_head(
    x,
    w_t,
    bias2d,
    *,
    tm: int = 512,                     # multiple of 256; raise to 768 for v6e prefill
    tn: int = 1024,                    # lane-dense vocab tile (multiple of 128)
    compute_dtype=jnp.bfloat16,        # pass jnp.float32 (+ f32 prepped W) for exact logits
    out_dtype=None,
    cast_activations: bool = True,     # cast x to compute_dtype once in the wrapper
    w_buffers: int = 2,                # 3 helps v5e decode (exposed weight DMA stream)
    w_tile_budget_bytes: int = 8 << 20,   # per-buffer weight tile cap (v7x 64MiB VMEM safe)
    x_slab_budget_bytes: int = 8 << 20,   # per-buffer resident x slab cap
    vmem_limit_bytes=None,
):
    """
    x:      (B, S, E)
    w_t:    (E, V)  pre-transposed weight from prepare_lm_head_params()
    bias2d: (1, V)  f32 bias from prepare_lm_head_params()
    returns (B, S, V) in `out_dtype` (defaults to x.dtype)
    """
    B, S, E = x.shape
    E_w, V = w_t.shape
    assert E_w == E, "w_t must be (embedding_dimension, vocab); use prepare_lm_head_params"
    assert bias2d.shape == (1, V)

    out_dtype = jnp.dtype(x.dtype if out_dtype is None else out_dtype)
    M = B * S

    x2d = x.reshape(M, E)
    if cast_activations and x2d.dtype != jnp.dtype(compute_dtype):
        # Halves the x HBM stream + resident VMEM slab; x is tiny relative to W.
        x2d = x2d.astype(compute_dtype)

    w_itemsize = jnp.dtype(w_t.dtype).itemsize
    x_itemsize = jnp.dtype(x2d.dtype).itemsize

    # ---- tile selection (no padding of any operand) ----
    # Vocab tile: lane-dense multiple of 128, capped so one (E, tn) weight buffer
    # fits the per-buffer budget.  Full-V block for small vocabularies.
    if V <= tn:
        tn = V
    else:
        tn_cap = max(128, (w_tile_budget_bytes // max(1, E * w_itemsize)) // 128 * 128)
        tn = max(128, (min(tn, tn_cap) // 128) * 128)

    # M tile: single full-M block when M is small (no padded-row waste); otherwise a
    # multiple-of-8 tile capped so the resident (tm, E) activation slab fits its budget.
    if M <= tm:
        tm = M
    else:
        tm_cap = max(8, (x_slab_budget_bytes // max(1, E * x_itemsize)) // 8 * 8)
        tm = max(8, (min(tm, tm_cap) // 8) * 8)

    grid = (_cdiv(M, tm), _cdiv(V, tn))
    num_i = grid[0]

    # ---- VMEM limit derived from the actual tiles (capped for v7x's 64 MiB/TC) ----
    x_slab_b = tm * E * x_itemsize
    w_tile_b = E * tn * w_itemsize
    o_tile_b = tm * tn * out_dtype.itemsize
    b_tile_b = 8 * tn * jnp.dtype(bias2d.dtype).itemsize   # sublane-padded
    if vmem_limit_bytes is None:
        need = (2 * x_slab_b + max(2, w_buffers) * w_tile_b + 2 * o_tile_b + 2 * b_tile_b)
        vmem_limit_bytes = int(min(max(32 << 20, int(need * 1.3) + (1 << 20)), 64 << 20))

    # ---- cost estimate reflecting real streamed traffic ----
    cost = pl.CostEstimate(
        flops=2 * M * E * V,
        transcendentals=0,
        bytes_accessed=(
            x2d.size * x2d.dtype.itemsize                       # x streamed once (resident over j)
            + num_i * (w_t.size * w_itemsize                    # W streamed once per M tile
                       + bias2d.size * bias2d.dtype.itemsize)
            + M * V * out_dtype.itemsize                        # output written once
        ),
    )

    w_spec_kwargs = {} if w_buffers == 2 else {"pipeline_mode": pl.Buffered(w_buffers)}

    kernel = functools.partial(_lmhead_kernel, compute_dtype=jnp.dtype(compute_dtype))

    out2d = pl.pallas_call(
        kernel,
        out_shape=jax.ShapeDtypeStruct((M, V), out_dtype),
        grid_spec=pltpu.PrefetchScalarGridSpec(
            num_scalar_prefetch=0,
            grid=grid,
            in_specs=[
                pl.BlockSpec((tm, E), lambda i, j: (i, 0)),                 # x slab, resident over j
                pl.BlockSpec((E, tn), lambda i, j: (0, j), **w_spec_kwargs),  # (E, V)-layout W tile
                pl.BlockSpec((1, tn), lambda i, j: (0, j)),                 # bias tile
            ],
            out_specs=pl.BlockSpec((tm, tn), lambda i, j: (i, j)),
        ),
        compiler_params=pltpu.CompilerParams(
            dimension_semantics=("parallel", "parallel"),
            vmem_limit_bytes=vmem_limit_bytes,
        ),
        cost_estimate=cost,
    )(x2d, w_t, bias2d)

    return out2d.reshape(B, S, V)


if __name__ == "__main__":
    # Small shapes consistent with the module's forward pass.
    batch, seq, emb, vocab = 2, 8, 32, 256

    key = jax.random.PRNGKey(0)
    kx, kw, kb = jax.random.split(key, 3)

    x = jax.random.normal(kx, (batch, seq, emb), dtype=jnp.float32)

    # Deterministic nn.Linear-style init: U(-1/sqrt(E), 1/sqrt(E)), PyTorch (V, E) layout.
    bound = 1.0 / (emb ** 0.5)
    weight = jax.random.uniform(kw, (vocab, emb), jnp.float32, -bound, bound)
    bias = jax.random.uniform(kb, (vocab,), jnp.float32, -bound, bound)

    # --- production path: one-time bf16 prep (outside hot path), then the kernel ---
    w_t, b2d = prepare_lm_head_params(weight, bias, param_dtype=jnp.bfloat16)
    out = lm_head(x, w_t, b2d)
    jax.block_until_ready(out)
    assert out.shape == (batch, seq, vocab)
    assert out.dtype == jnp.float32

    # Reference matching the kernel arithmetic (bf16 MXU feed, f32 accum, f32 bias).
    ref_bf16 = (
        jnp.dot(
            x.reshape(-1, emb).astype(jnp.bfloat16),
            weight.T.astype(jnp.bfloat16),
            preferred_element_type=jnp.float32,
        ).reshape(batch, seq, vocab)
        + bias
    )
    ref_f32 = x @ weight.T + bias
    assert jnp.allclose(out, ref_bf16, atol=1e-2, rtol=1e-2)
    assert jnp.allclose(out, ref_f32, atol=2e-2, rtol=2e-2)

    # --- opt-in f32 compute path (for callers needing non-bf16 logits) ---
    w_t32, b2d32 = prepare_lm_head_params(weight, bias, param_dtype=jnp.float32)
    out32 = lm_head(x, w_t32, b2d32, compute_dtype=jnp.float32)
    jax.block_until_ready(out32)
    assert jnp.allclose(out32, ref_f32, atol=2e-2, rtol=2e-2)

    # --- ragged shapes: no wrapper padding; cdiv grid with masked tail blocks ---
    b2, s2, e2, v2 = 1, 21, 48, 200
    k2 = jax.random.split(key, 6)
    x2 = jax.random.normal(k2[3], (b2, s2, e2), dtype=jnp.float32)
    bnd2 = 1.0 / (e2 ** 0.5)
    w2 = jax.random.uniform(k2[4], (v2, e2), jnp.float32, -bnd2, bnd2)
    bb2 = jax.random.uniform(k2[5], (v2,), jnp.float32, -bnd2, bnd2)
    w2_t, bb2_2d = prepare_lm_head_params(w2, bb2)
    out2 = lm_head(x2, w2_t, bb2_2d, tm=16, tn=128)   # forces ragged M and V tail blocks
    jax.block_until_ready(out2)
    assert out2.shape == (b2, s2, v2)
    ref2 = x2 @ w2.T + bb2
    assert jnp.allclose(out2, ref2, atol=2e-2, rtol=2e-2)

    print("KERNEL_OK")
</pallas_src>

<mosaic_0001>
module attributes {stable_mosaic.version = 11 : i64} {
  func.func @_lmhead_kernel(%arg0: i32, %arg1: i32, %arg2: memref<16x32xbf16, #tpu.memory_space<vmem>>, %arg3: memref<32x256xbf16, #tpu.memory_space<vmem>>, %arg4: memref<1x256xf32, #tpu.memory_space<vmem>>, %arg5: memref<16x256xf32, #tpu.memory_space<vmem>>) attributes {dimension_semantics = [#tpu.dimension_semantics<parallel>, #tpu.dimension_semantics<parallel>], iteration_bounds = array<i64: 1, 1>, scalar_prefetch = 0 : i64, scratch_operands = 0 : i64, tpu.core_type = #tpu.core_type<tc>, window_params = [{transform_indices = @transform_0, window_bounds = array<i64: 16, 32>}, {transform_indices = @transform_1, window_bounds = array<i64: 32, 256>}, {transform_indices = @transform_2, window_bounds = array<i64: 1, 256>}, {transform_indices = @transform_3, window_bounds = array<i64: 16, 256>}]} {
    %c0 = arith.constant 0 : index
    %c0_0 = arith.constant 0 : index
    %0 = vector.load %arg2[%c0, %c0_0] : memref<16x32xbf16, #tpu.memory_space<vmem>>, vector<16x32xbf16>
    %c0_1 = arith.constant 0 : index
    %c0_2 = arith.constant 0 : index
    %1 = vector.load %arg3[%c0_1, %c0_2] : memref<32x256xbf16, #tpu.memory_space<vmem>>, vector<32x256xbf16>
    %cst = arith.constant dense<0.000000e+00> : vector<16x256xf32>
    %2 = tpu.matmul %0, %1, %cst {dimension_numbers = #tpu.dot_dimension_numbers<[1], [0], [0], [1], [0, 0, 1, 1], [], []>} : vector<16x32xbf16>, vector<32x256xbf16>, vector<16x256xf32> -> vector<16x256xf32>
    %c0_3 = arith.constant 0 : index
    %c0_4 = arith.constant 0 : index
    %3 = vector.load %arg4[%c0_3, %c0_4] : memref<1x256xf32, #tpu.memory_space<vmem>>, vector<1x256xf32>
    %4 = vector.broadcast %3 : vector<1x256xf32> to vector<16x256xf32>
    %5 = arith.addf %2, %4 : vector<16x256xf32>
    %c0_5 = arith.constant 0 : index
    %c0_6 = arith.constant 0 : index
    %6 = vector.load %arg5[%c0_5, %c0_6] : memref<16x256xf32, #tpu.memory_space<vmem>>, vector<16x256xf32>
    tpu.vector_store %arg5[%c0_5, %c0_6], %5 {strides = array<i32>} : memref<16x256xf32, #tpu.memory_space<vmem>>, vector<16x256xf32>,
    return
  }
  func.func @transform_0(%arg0: i32, %arg1: i32) -> (i32, i32) {
    %c0_i32 = arith.constant 0 : i32
    %c0_i32_0 = arith.constant 0 : i32
    return %arg0, %c0_i32 : i32, i32
  }
  func.func @transform_1(%arg0: i32, %arg1: i32) -> (i32, i32) {
    %c0_i32 = arith.constant 0 : i32
    %c0_i32_0 = arith.constant 0 : i32
    return %c0_i32, %arg1 : i32, i32
  }
  func.func @transform_2(%arg0: i32, %arg1: i32) -> (i32, i32) {
    %c0_i32 = arith.constant 0 : i32
    %c0_i32_0 = arith.constant 0 : i32
    return %c0_i32, %arg1 : i32, i32
  }
  func.func @transform_3(%arg0: i32, %arg1: i32) -> (i32, i32) {
    %c0_i32 = arith.constant 0 : i32
    return %arg0, %arg1 : i32, i32
  }
}

</mosaic_0001>

<llo_original>
// kernel: tpu_custom_call.1
$region0: #{tpu_custom_call.1}
  #allocation0 [shape = 'u32[]', space=smem, size = 0x4, offset = 0x4, fixed_abs, tag = 'smem constant byte address 0x4 - core index']
  #allocation1 [shape = 'u32[144,128]{1,0:T(1,128)}', space=vmem, size = 0x12000, scoped, tag = 'internal scratch']
  %s0 = inlined_call_operand.hbm [shape: bf16[16,32], index: 0, kind: input, shape index: {}]
  %s1 = inlined_call_operand.hbm [shape: bf16[32,256], index: 1, kind: input, shape index: {}]
  %s2 = inlined_call_operand.vmem [shape: f32[1,256], index: 2, kind: input, shape index: {}]
  %s3 = inlined_call_operand.hbm [shape: f32[16,256], index: 3, kind: output, shape index: {}]
  %s4 = sld [smem:[#allocation0]]
  $region30: #{tpu_custom_call.1} parent=0
    _
  %s6 = ssub.s32 1, %s4
  %s7 = scalar_select 0, %s6, %s4
  $region1: #{tpu_custom_call.1} parent=0
    #allocation2 [shape = 'u8[4096]{0}', space=vmem, size = 0x1000, scoped, tag = 'input window, operand 0, single buffered']
    #allocation3 [shape = 's32[1]{0}', space=sflag, size = 0x4, scoped, tag = 'scoped memory for tpu_custom_call.1']
    #allocation4 [shape = 's32[1]{0}', space=sflag, size = 0x4, scoped, tag = 'scoped memory for tpu_custom_call.1']
    #allocation5 [shape = 'u8[16384]{0}', space=vmem, size = 0x4000, scoped, tag = 'input window, operand 1, single buffered']
    #allocation6 [shape = 's32[1]{0}', space=sflag, size = 0x4, scoped, tag = 'scoped memory for tpu_custom_call.1']
    #allocation7 [shape = 'u8[16384]{0}', space=vmem, size = 0x4000, scoped, tag = 'output window, operand 0, single buffered']
    %8 = vsyncpa [#allocation3], 0
    %9 = vsyncpa [#allocation6], 0
    %10 = vsyncpa [#allocation4], 0
    // Predicated region
    $region2: #{tpu_custom_call.1} parent=1 // pred_check
      _
    $region3: #{tpu_custom_call.1} parent=1 // pred_check_branch
      %12 = sbr.rel (0) target = $region5
    $region4: #{tpu_custom_call.1} parent=1 // pred_region
      %s14 = ssub.s32 128, 128
      %15 = vsyncadd [#allocation3], %s14
      %s16 = sshll.u32 [#allocation2], 4
      %s17 = int_to_ptr.vmem [resolvable:$true] %s16
      %22 = dma.hbm_to_vmem [thread:$0]  %s0, 128, %s17, [#allocation3], 64, 64, 4
    $region5: #{tpu_custom_call.1} parent=1 // pred_fallthru
      _
    // Predicated region
    $region6: #{tpu_custom_call.1} parent=1 // pred_check
      _
    $region7: #{tpu_custom_call.1} parent=1 // pred_check_branch
      %24 = sbr.rel (0) target = $region9
    $region8: #{tpu_custom_call.1} parent=1 // pred_region
      %s26 = ssub.s32 512, 512
      %27 = vsyncadd [#allocation6], %s26
      %s28 = sshll.u32 [#allocation5], 4
      %s29 = int_to_ptr.vmem [resolvable:$true] %s28
      %34 = dma.hbm_to_vmem [thread:$0]  %s1, 512, %s29, [#allocation6], 128, 128, 8
    $region9: #{tpu_custom_call.1} parent=1 // pred_fallthru
      _
    // Predicated region
    $region10: #{tpu_custom_call.1} parent=1 // pred_check
      _
    $region11: #{tpu_custom_call.1} parent=1 // pred_check_branch
      %36 = sbr.rel (0) target = $region13
    $region12: #{tpu_custom_call.1} parent=1 // pred_region
      _
    $region13: #{tpu_custom_call.1} parent=1 // pred_fallthru
      _
    // Predicated region
    $region14: #{tpu_custom_call.1} parent=1 // pred_check
      _
    $region15: #{tpu_custom_call.1} parent=1 // pred_check_branch
      %38 = sbr.rel (0) target = $region17
    $region16: #{tpu_custom_call.1} parent=1 // pred_region
      %39 = dma.done [#allocation3], 128
    $region17: #{tpu_custom_call.1} parent=1 // pred_fallthru
      _
    // Predicated region
    $region18: #{tpu_custom_call.1} parent=1 // pred_check
      _
    $region19: #{tpu_custom_call.1} parent=1 // pred_check_branch
      %41 = sbr.rel (0) target = $region21
    $region20: #{tpu_custom_call.1} parent=1 // pred_region
      %42 = dma.done [#allocation6], 512
    $region21: #{tpu_custom_call.1} parent=1 // pred_fallthru
      _
    %v44 = vld [vmem:[#allocation2] sm:$0xf]
    %v45 = vld [vmem:[#allocation2 + $0x4] sm:$0xf]
    %v46 = vld [vmem:[#allocation5] sm:$0xff]
    %v47 = vld [vmem:[#allocation5 + $0x8] sm:$0xff]
    %v48 = vld [vmem:[#allocation5 + $0x10] sm:$0xff]
    %v49 = vld [vmem:[#allocation5 + $0x18] sm:$0xff]
    %v50 = vld [vmem:[%s2] sm:$0x3]
    %v52 = vlaneseq
    %v53 = vshrl.u32 %v52, 7
    %v54 = vsub.s32 0, %v53
    %v55 = vrot.slane %v50, %v54
    %v56 = vlaneseq
    %v57 = vshrl.u32 %v56, 7
    %v58 = vsub.s32 1, %v57
    %v59 = vrot.slane %v50, %v58
    %v64 = vunpack.c.l.b16 %v44
    %v65 = vunpack.c.l.b16 %v45
    %v66 = vpack.c.b16 %v65, %v64
    %v71 = vunpack.c.l.b16 %v46
    %v72 = vunpack.c.h.b16 %v46
    %v73 = vunpack.c.l.b16 %v47
    %v74 = vunpack.c.h.b16 %v47
    %v75 = vunpack.c.l.b16 %v48
    %v76 = vunpack.c.h.b16 %v48
    %v77 = vunpack.c.l.b16 %v49
    %v78 = vunpack.c.h.b16 %v49
    %v79 = vpack.c.b16 %v73, %v71
    %v80 = vpack.c.b16 %v74, %v72
    %v81 = vpack.c.b16 %v77, %v75
    %v82 = vpack.c.b16 %v78, %v76
    %vm87 = vcmask 261120
    %v89 = vsel %vm87, %v66, 0
    %91 = vmatprep.subr.bf16.mxu0 %v80
    %92 = vmatpush1.bf16.msra.mxu0 %v79
    %93 = vmatprep.subr.bf16.mxu0 %v82
    %94 = vmatpush1.bf16.msra.mxu0 %v81
    %95 = vmatprep.subr.bf16.mxu0 0
    %96 = vmatpush1.bf16.msra.mxu0 0
    %97 = vmatprep.subr.bf16.mxu0 0
    %98 = vmatpush1.bf16.msra.mxu0 0
    %99 = vmatprep.subr.bf16.mxu0 0
    %100 = vmatpush1.bf16.msra.mxu0 0
    %101 = vmatprep.subr.bf16.mxu0 0
    %102 = vmatpush1.bf16.msra.mxu0 0
    %103 = vmatprep.subr.bf16.mxu0 0
    %104 = vmatpush1.bf16.msra.mxu0 0
    %105 = vmatprep.subr.bf16.mxu0 0
    %106 = vmatpush1.bf16.msra.mxu0 0
    %107 = vmatprep.subr.bf16.mxu0 0
    %108 = vmatpush1.bf16.msra.mxu0 0
    %109 = vmatprep.subr.bf16.mxu0 0
    %110 = vmatpush1.bf16.msra.mxu0 0
    %111 = vmatprep.subr.bf16.mxu0 0
    %112 = vmatpush1.bf16.msra.mxu0 0
    %113 = vmatprep.subr.bf16.mxu0 0
    %114 = vmatpush1.bf16.msra.mxu0 0
    %115 = vmatprep.subr.bf16.mxu0 0
    %116 = vmatpush1.bf16.msra.mxu0 0
    %117 = vmatprep.subr.bf16.mxu0 0
    %118 = vmatpush1.bf16.msra.mxu0 0
    %119 = vmatprep.subr.bf16.mxu0 0
    %120 = vmatpush1.bf16.msra.mxu0 0
    %121 = vmatprep.subr.bf16.mxu0 0
    %122 = vmatpush1.bf16.msra.mxu0 0
    %123 = vmatprep.mubr.bf16.mxu0 0
    %124 = vmatmul.mubr.bf16.gmra.mrb[0].mxu0 %v89
    %v125 = vpop.f32.mrb[0].mxu0
    %v126 = vadd.f32 %v55, %v125
    %v127 = vpop.f32.mrb[0].mxu0
    %v128 = vadd.f32 %v59, %v127
    %v129 = vpop.f32.mrb[0].mxu0
    %v130 = vadd.f32 %v55, %v129
    %v131 = vpop.f32.mrb[0].mxu0
    %v132 = vadd.f32 %v59, %v131
    %133 = vdwg.mxu0
    %134 = vst [vmem:[#allocation7] sm:$0xff] %v126
    %135 = vst [vmem:[#allocation7 + $0x8] sm:$0xff] %v128
    %136 = vst [vmem:[#allocation7 + $0x10] sm:$0xff] %v130
    %137 = vst [vmem:[#allocation7 + $0x18] sm:$0xff] %v132
    // Predicated region
    $region22: #{tpu_custom_call.1} parent=1 // pred_check
      _
    $region23: #{tpu_custom_call.1} parent=1 // pred_check_branch
      %139 = sbr.rel (0) target = $region25
    $region24: #{tpu_custom_call.1} parent=1 // pred_region
      %s141 = ssub.s32 512, 512
      %142 = vsyncadd [#allocation4], %s141
      %s143 = sshll.u32 [#allocation7], 4
      %s144 = int_to_ptr.vmem [resolvable:$true] %s143
      %149 = dma.vmem_to_hbm [thread:$0]  %s144, 512, %s3, [#allocation4], 256, 256, 16
    $region25: #{tpu_custom_call.1} parent=1 // pred_fallthru
      _
    // Predicated region
    $region26: #{tpu_custom_call.1} parent=1 // pred_check
      _
    $region27: #{tpu_custom_call.1} parent=1 // pred_check_branch
      %151 = sbr.rel (0) target = $region29
    $region28: #{tpu_custom_call.1} parent=1 // pred_region
      %152 = dma.done [#allocation4], 512
    $region29: #{tpu_custom_call.1} parent=1 // pred_fallthru
      _
    %153 = vsyncpa [#allocation3], 1
    %154 = vsyncpa [#allocation6], 1
    %155 = vsyncpa [#allocation4], 1

</llo_original>
